<compile_context>
chip_gen: v7x
topology: tpu7x:2x2x1
jax: 0.10.0
libtpu: 0.0.40
codegen_flags: <defaults>
</compile_context>

<pallas_src>
import math
import functools

import jax
import jax.numpy as jnp
from jax import lax
from jax.experimental import pallas as pl
from jax.experimental.pallas import tpu as pltpu


def make_positional_encoding_table(max_len: int, d_model: int) -> jnp.ndarray:
    """Deterministic sinusoidal table, identical to the PyTorch __init__."""
    position = jnp.arange(0, max_len, dtype=jnp.float32)[:, None]          # [L, 1]
    div_term = jnp.exp(
        jnp.arange(0, d_model, 2, dtype=jnp.float32)
        * -(math.log(10000.0) / d_model)
    )                                                                       # [ceil(D/2)]
    pe = jnp.zeros((max_len, d_model), dtype=jnp.float32)
    pe = pe.at[:, 0::2].set(jnp.sin(position * div_term))
    if d_model % 2 == 0:
        pe = pe.at[:, 1::2].set(jnp.cos(position * div_term))
    else:
        pe = pe.at[:, 1::2].set(jnp.cos(position * div_term[: d_model // 2]))
    return pe


# ---------------------------------------------------------------------------
# Pallas kernel: operates on a lane-dense folded view.
#   x_ref:  (B_blk, TR, 128)  batch-blocked tile of folded (S*D) rows
#   pe_ref: (TR, 128)         matching tile of the folded positional table
#   o_ref:  (B_blk, TR, 128)
# ---------------------------------------------------------------------------
def _pe_add_kernel(x_ref, pe_ref, o_ref, *, p: float, training: bool, seed: int,
                   blk_b: int, blk_r: int, total_rows: int):
    if not (training and p > 0.0):
        # Eval path: dtype-native add (bf16 stays bf16 -> fewer converts, less
        # vreg pressure; on v5e the compiler upconverts anyway).
        o_ref[...] = x_ref[...] + pe_ref[...][None]
        return

    if p >= 1.0:
        # torch Dropout(p=1) zeros everything; avoid inf scale / wrapped threshold.
        o_ref[...] = jnp.zeros_like(o_ref)
        return

    y = x_ref[...].astype(jnp.float32) + pe_ref[...][None].astype(jnp.float32)

    # Counter-based PRNG: lowbias32 hash of (seed, global element index).
    # Uses only jnp/lax ops so it works on Mosaic and in interpret mode.
    r = pl.program_id(0)
    b = pl.program_id(1)
    shape = y.shape
    bi = lax.broadcasted_iota(jnp.int32, shape, 0).astype(jnp.uint32)
    ri = lax.broadcasted_iota(jnp.int32, shape, 1).astype(jnp.uint32)
    li = lax.broadcasted_iota(jnp.int32, shape, 2).astype(jnp.uint32)
    gb = (b * blk_b).astype(jnp.uint32) + bi          # global batch row
    gr = (r * blk_r).astype(jnp.uint32) + ri          # global folded row
    idx = (gb * jnp.uint32(total_rows) + gr) * jnp.uint32(128) + li

    seed_mix = jnp.uint32((int(seed) * 0x9E3779B1) & 0xFFFFFFFF)
    h = idx ^ seed_mix
    h = h ^ (h >> 16)
    h = h * jnp.uint32(0x7FEB352D)
    h = h ^ (h >> 15)
    h = h * jnp.uint32(0x846CA68B)
    h = h ^ (h >> 16)

    # Keep with probability (1 - p): drop iff h < thresh (saturating threshold).
    thresh = min(int(round(p * 4294967296.0)), 0xFFFFFFFF)
    scale = jnp.float32(1.0 / (1.0 - p))
    # Single select: mask + inverted-dropout scale in one jnp.where.
    o_ref[...] = jnp.where(h >= jnp.uint32(thresh), y * scale, 0.0).astype(o_ref.dtype)


def _choose_tiles(B: int, R: int, itemsize: int,
                  target_x_block_bytes: int = 4 * 1024 * 1024):
    """Batch-block + row-tile so the x block is ~target bytes (mult of 8 rows)."""
    B_blk = min(B, 8)
    rows = target_x_block_bytes // (B_blk * 128 * itemsize)
    rows = max(8, (rows // 8) * 8)
    TR = R if rows >= R else rows     # full extent always legal; else multiple of 8
    return B_blk, TR


def _jax_fallback(x, pe_slice, p, training, seed):
    y = x + pe_slice[None, :, :].astype(x.dtype)
    if training and p > 0.0:
        if p >= 1.0:
            return jnp.zeros_like(y)
        keep = jax.random.bernoulli(jax.random.PRNGKey(seed), 1.0 - p, y.shape)
        y = jnp.where(keep, y / (1.0 - p), 0.0).astype(x.dtype)
    return y


def positional_encoding_forward(
    x: jnp.ndarray,
    pe_table: jnp.ndarray,
    *,
    p: float = 0.1,
    training: bool = False,
    seed: int = 0,
    use_pallas: bool | None = None,
    donate_x: bool = False,
) -> jnp.ndarray:
    """x: [B, S, D] (f32 or bf16).  pe_table: [max_len, D] f32."""
    B, S, D = x.shape
    max_len = pe_table.shape[0]
    if S > max_len:
        raise ValueError(
            f"Sequence length {S} exceeds positional encoding max_len {max_len}."
        )
    # TODO(synk): torch keeps pe as an f32 buffer (bf16 x would type-promote to
    # f32 output there); here pe is cast to x.dtype to minimize HBM traffic.
    pe_slice = pe_table[:S].astype(x.dtype)    # [S, D]

    row_elems = S * D
    foldable = (row_elems % 128) == 0
    tiny = (B * row_elems) < (1 << 16)         # kernel/launch overhead dominates

    if use_pallas is None:
        use_pallas = foldable and not tiny
    if use_pallas and not foldable:
        # TODO(synk): S*D not a multiple of 128 would need padding to stay
        # lane-dense; fall back to plain JAX (XLA fuses this add anyway).
        use_pallas = False

    if not use_pallas:
        return _jax_fallback(x, pe_slice, p, training, seed)

    R = row_elems // 128
    # NOTE: on default row-major layouts these reshapes are bitcasts, not copies.
    xf = x.reshape(B, R, 128)
    pef = pe_slice.reshape(R, 128)

    itemsize = jnp.dtype(x.dtype).itemsize
    B_blk, TR = _choose_tiles(B, R, itemsize)
    grid = (pl.cdiv(R, TR), pl.cdiv(B, B_blk))   # row tile OUTER -> pe reused over batch

    # VMEM budget: double-buffered x + out + pe blocks, 1.5x headroom, clamped to
    # 64 MiB (fits v7x's 64 MiB physical VMEM, lifts v5e's 16 MiB scoped default).
    x_blk_bytes = B_blk * TR * 128 * itemsize
    pe_blk_bytes = TR * 128 * itemsize
    working = 2 * (2 * x_blk_bytes + pe_blk_bytes)
    vmem_limit = int(min(64 * 1024 * 1024, max(32 * 1024 * 1024, working * 3 // 2)))

    kernel = functools.partial(
        _pe_add_kernel, p=float(p), training=bool(training), seed=int(seed),
        blk_b=int(B_blk), blk_r=int(TR), total_rows=int(R))

    out = pl.pallas_call(
        kernel,
        out_shape=jax.ShapeDtypeStruct((B, R, 128), x.dtype),
        grid_spec=pltpu.PrefetchScalarGridSpec(
            num_scalar_prefetch=0,
            grid=grid,
            in_specs=[
                pl.BlockSpec((B_blk, TR, 128), lambda r, b: (b, r, 0)),  # x tile
                pl.BlockSpec((TR, 128), lambda r, b: (r, 0)),            # pe tile (const over b)
            ],
            out_specs=pl.BlockSpec((B_blk, TR, 128), lambda r, b: (b, r, 0)),
        ),
        compiler_params=pltpu.CompilerParams(
            dimension_semantics=("parallel", "parallel"),
            vmem_limit_bytes=vmem_limit,
        ),
        input_output_aliases=({0: 0} if donate_x else {}),
    )(xf, pef)

    return out.reshape(B, S, D)


if __name__ == "__main__":
    # Small shapes consistent with the module: batch=2, seq=8, d_model=32.
    B, S, D = 2, 8, 32
    MAX_LEN = 1024
    DROPOUT_P = 0.1

    key = jax.random.PRNGKey(0)
    x = jax.random.normal(key, (B, S, D), dtype=jnp.float32)
    pe_table = make_positional_encoding_table(MAX_LEN, D)

    # Eval-mode forward (dropout identity). Force the Pallas path even at this
    # tiny shape so the kernel itself is exercised.
    out = positional_encoding_forward(
        x, pe_table, p=DROPOUT_P, training=False, use_pallas=True
    )
    out = jax.block_until_ready(out)

    ref = x + pe_table[None, :S, :]
    assert out.shape == (B, S, D)
    assert jnp.allclose(out, ref, atol=1e-6), "eval-mode mismatch vs reference"

    # Training-mode forward: every element must be either 0 (dropped) or
    # ref/(1-p) (kept, inverted-dropout scaled), and at least one element kept.
    out_tr = positional_encoding_forward(
        x, pe_table, p=DROPOUT_P, training=True, seed=123, use_pallas=True
    )
    out_tr = jax.block_until_ready(out_tr)
    scaled = ref / (1.0 - DROPOUT_P)
    is_zero = out_tr == 0.0
    is_kept = jnp.abs(out_tr - scaled) < 1e-4
    assert bool(jnp.all(is_zero | is_kept)), "dropout values not in {0, ref/(1-p)}"
    assert bool(jnp.any(is_kept)), "dropout dropped everything at p=0.1"

    # TODO(synk): training-mode dropout is deterministic per (seed, element index)
    # via a counter hash; it does not bit-match torch's RNG stream.
    print("KERNEL_OK")
</pallas_src>

<mosaic_0001>
module attributes {stable_mosaic.version = 11 : i64} {
  func.func @_pe_add_kernel(%arg0: i32, %arg1: i32, %arg2: memref<2x2x128xf32, #tpu.memory_space<vmem>>, %arg3: memref<2x128xf32, #tpu.memory_space<vmem>>, %arg4: memref<2x2x128xf32, #tpu.memory_space<vmem>>) attributes {dimension_semantics = [#tpu.dimension_semantics<parallel>, #tpu.dimension_semantics<parallel>], iteration_bounds = array<i64: 1, 1>, scalar_prefetch = 0 : i64, scratch_operands = 0 : i64, tpu.core_type = #tpu.core_type<tc>, window_params = [{transform_indices = @transform_0, window_bounds = array<i64: 2, 2, 128>}, {transform_indices = @transform_1, window_bounds = array<i64: 2, 128>}, {transform_indices = @transform_2, window_bounds = array<i64: 2, 2, 128>}]} {
    %c0 = arith.constant 0 : index
    %c0_0 = arith.constant 0 : index
    %c0_1 = arith.constant 0 : index
    %0 = vector.load %arg2[%c0, %c0_0, %c0_1] : memref<2x2x128xf32, #tpu.memory_space<vmem>>, vector<2x2x128xf32>
    %c0_2 = arith.constant 0 : index
    %c0_3 = arith.constant 0 : index
    %1 = vector.load %arg3[%c0_2, %c0_3] : memref<2x128xf32, #tpu.memory_space<vmem>>, vector<2x128xf32>
    %2 = vector.shape_cast %1 : vector<2x128xf32> to vector<1x2x128xf32>
    %3 = vector.broadcast %2 : vector<1x2x128xf32> to vector<2x2x128xf32>
    %4 = arith.addf %0, %3 : vector<2x2x128xf32>
    %c0_4 = arith.constant 0 : index
    %c0_5 = arith.constant 0 : index
    %c0_6 = arith.constant 0 : index
    %5 = vector.load %arg4[%c0_4, %c0_5, %c0_6] : memref<2x2x128xf32, #tpu.memory_space<vmem>>, vector<2x2x128xf32>
    tpu.vector_store %arg4[%c0_4, %c0_5, %c0_6], %4 {strides = array<i32>} : memref<2x2x128xf32, #tpu.memory_space<vmem>>, vector<2x2x128xf32>,
    return
  }
  func.func @transform_0(%arg0: i32, %arg1: i32) -> (i32, i32, i32) {
    %c0_i32 = arith.constant 0 : i32
    %c0_i32_0 = arith.constant 0 : i32
    return %arg1, %arg0, %c0_i32 : i32, i32, i32
  }
  func.func @transform_1(%arg0: i32, %arg1: i32) -> (i32, i32) {
    %c0_i32 = arith.constant 0 : i32
    %c0_i32_0 = arith.constant 0 : i32
    return %arg0, %c0_i32 : i32, i32
  }
  func.func @transform_2(%arg0: i32, %arg1: i32) -> (i32, i32, i32) {
    %c0_i32 = arith.constant 0 : i32
    %c0_i32_0 = arith.constant 0 : i32
    return %arg1, %arg0, %c0_i32 : i32, i32, i32
  }
}

</mosaic_0001>

<llo_original>
// kernel: tpu_custom_call.1
$region0: #{tpu_custom_call.1}
  #allocation0 [shape = 'u32[]', space=smem, size = 0x4, offset = 0x4, fixed_abs, tag = 'smem constant byte address 0x4 - core index']
  #allocation1 [shape = 'u32[144,128]{1,0:T(1,128)}', space=vmem, size = 0x12000, scoped, tag = 'internal scratch']
  %s0 = inlined_call_operand.hbm [shape: f32[2,2,128], index: 0, kind: input, shape index: {}]
  %s1 = inlined_call_operand.vmem [shape: f32[2,128], index: 1, kind: input, shape index: {}]
  %s2 = inlined_call_operand.hbm [shape: f32[2,2,128], index: 2, kind: output, shape index: {}]
  %s3 = sld [smem:[#allocation0]]
  $region22: #{tpu_custom_call.1} parent=0
    _
  %s5 = ssub.s32 1, %s3
  %s6 = scalar_select 0, %s5, %s3
  $region1: #{tpu_custom_call.1} parent=0
    #allocation2 [shape = 'u8[2048]{0}', space=vmem, size = 0x800, scoped, tag = 'input window, operand 0, single buffered']
    #allocation3 [shape = 's32[1]{0}', space=sflag, size = 0x4, scoped, tag = 'scoped memory for tpu_custom_call.1']
    #allocation4 [shape = 's32[1]{0}', space=sflag, size = 0x4, scoped, tag = 'scoped memory for tpu_custom_call.1']
    #allocation5 [shape = 'u8[2048]{0}', space=vmem, size = 0x800, scoped, tag = 'output window, operand 0, single buffered']
    %7 = vsyncpa [#allocation3], 0
    %8 = vsyncpa [#allocation4], 0
    // Predicated region
    $region2: #{tpu_custom_call.1} parent=1 // pred_check
      _
    $region3: #{tpu_custom_call.1} parent=1 // pred_check_branch
      %10 = sbr.rel (0) target = $region5
    $region4: #{tpu_custom_call.1} parent=1 // pred_region
      %s12 = ssub.s32 64, 64
      %13 = vsyncadd [#allocation3], %s12
      %s14 = sshll.u32 [#allocation2], 4
      %s15 = int_to_ptr.vmem [resolvable:$true] %s14
      %20 = dma.hbm_to_vmem [thread:$0]  %s0, 64, %s15, [#allocation3], 32, 32, 2
    $region5: #{tpu_custom_call.1} parent=1 // pred_fallthru
      _
    // Predicated region
    $region6: #{tpu_custom_call.1} parent=1 // pred_check
      _
    $region7: #{tpu_custom_call.1} parent=1 // pred_check_branch
      %22 = sbr.rel (0) target = $region9
    $region8: #{tpu_custom_call.1} parent=1 // pred_region
      _
    $region9: #{tpu_custom_call.1} parent=1 // pred_fallthru
      _
    // Predicated region
    $region10: #{tpu_custom_call.1} parent=1 // pred_check
      _
    $region11: #{tpu_custom_call.1} parent=1 // pred_check_branch
      %24 = sbr.rel (0) target = $region13
    $region12: #{tpu_custom_call.1} parent=1 // pred_region
      %25 = dma.done [#allocation3], 64
    $region13: #{tpu_custom_call.1} parent=1 // pred_fallthru
      _
    %v26 = vld [vmem:[#allocation2] sm:$0x3]
    %v27 = vld [vmem:[#allocation2 + $0x2] sm:$0x3]
    %v28 = vld [vmem:[%s1] sm:$0x3]
    %v29 = vadd.f32 %v26, %v28
    %v30 = vadd.f32 %v27, %v28
    %31 = vst [vmem:[#allocation5] sm:$0x3] %v29
    %32 = vst [vmem:[#allocation5 + $0x2] sm:$0x3] %v30
    // Predicated region
    $region14: #{tpu_custom_call.1} parent=1 // pred_check
      _
    $region15: #{tpu_custom_call.1} parent=1 // pred_check_branch
      %34 = sbr.rel (0) target = $region17
    $region16: #{tpu_custom_call.1} parent=1 // pred_region
      %s36 = ssub.s32 64, 64
      %37 = vsyncadd [#allocation4], %s36
      %s38 = sshll.u32 [#allocation5], 4
      %s39 = int_to_ptr.vmem [resolvable:$true] %s38
      %44 = dma.vmem_to_hbm [thread:$0]  %s39, 64, %s2, [#allocation4], 32, 32, 2
    $region17: #{tpu_custom_call.1} parent=1 // pred_fallthru
      _
    // Predicated region
    $region18: #{tpu_custom_call.1} parent=1 // pred_check
      _
    $region19: #{tpu_custom_call.1} parent=1 // pred_check_branch
      %46 = sbr.rel (0) target = $region21
    $region20: #{tpu_custom_call.1} parent=1 // pred_region
      %47 = dma.done [#allocation4], 64
    $region21: #{tpu_custom_call.1} parent=1 // pred_fallthru
      _
    %48 = vsyncpa [#allocation3], 1
    %49 = vsyncpa [#allocation4], 1

</llo_original>
